<compile_context>
chip_gen: v7x
topology: tpu7x:2x2x1
jax: 0.10.0
libtpu: 0.0.40
codegen_flags: <defaults>
</compile_context>

<pallas_src>
import functools

import jax
import jax.numpy as jnp
from jax.experimental import pallas as pl
from jax.experimental.pallas import tpu as pltpu

BN_EPS = 1e-5    # nn.BatchNorm1d default eps
L2_EPS = 1e-12   # F.normalize default eps

# dot_general dimension_numbers for a @ b.T without materializing the transpose
_DOT_NT = (((1,), (1,)), ((), ()))


def _pick_tile(total, preferred, multiple=128):
    """Largest tile <= preferred that divides `total` and is a multiple of `multiple`.
    Falls back to the full dimension (always a legal BlockSpec block size)."""
    if total <= preferred:
        return total
    start = preferred - (preferred % multiple)
    for cand in range(start, multiple - 1, -multiple):
        if total % cand == 0:
            return cand
    return total


# ---------------------------------------------------------------------------
# Kernel 1: fused Linear (no bias) + BatchNorm1d (training-mode batch stats)
#           + optional ReLU.
#   grid = (N//tn, K//tk); bf16 MXU inputs, f32 accumulation in a VMEM scratch,
#   single-pass BN stats (E[x], E[x^2]) in the final-K epilogue, bf16 writeback.
#   B is never tiled: BN stats are per-feature over the full batch, so column
#   tiling is numerically identical to the untiled version.
# ---------------------------------------------------------------------------
def _linear_bn_kernel(x_ref, w_ref, o_ref, acc_ref, *, do_relu):
    k = pl.program_id(1)
    n_k = pl.num_programs(1)

    partial = jnp.dot(x_ref[...], w_ref[...], preferred_element_type=jnp.float32)

    @pl.when(k == 0)
    def _():
        acc_ref[...] = partial

    @pl.when(k > 0)
    def _():
        acc_ref[...] = acc_ref[...] + partial

    @pl.when(k == n_k - 1)
    def _():
        y = acc_ref[...]                                  # f32 epilogue
        b = y.shape[0]
        inv_b = 1.0 / b
        s1 = jnp.sum(y, axis=0, keepdims=True)
        s2 = jnp.sum(y * y, axis=0, keepdims=True)        # single pass over the block
        mean = s1 * inv_b
        var = jnp.maximum(s2 * inv_b - mean * mean, 0.0)  # biased var (train BN)
        y = (y - mean) * jax.lax.rsqrt(var + BN_EPS)      # gamma=1, beta=0 init
        if do_relu:
            y = jnp.maximum(y, 0.0)
        o_ref[...] = y.astype(o_ref.dtype)                # bf16 writeback


def linear_bn(x, w, *, do_relu, tk_pref=1024, tn_pref=512):
    """y = ReLU?(BN(x @ w)).  x: (B, K), w: (K, N) (Linear weight already transposed).
    Output is bf16 (activations are re-consumed as bf16 MXU inputs downstream).
    # NOTE: tile prefs chosen to fit v7x's 64 MiB VMEM; on v6e (128 MiB) sweeping
    # tn_pref -> 1024 / tk_pref -> 2048 gives fewer grid steps + fuller MXU feeds.
    """
    B, K = x.shape
    K2, N = w.shape
    assert K == K2
    tk = _pick_tile(K, tk_pref)
    tn = _pick_tile(N, tn_pref)
    # bf16 MXU inputs (halves HBM->VMEM DMA bytes); accumulation stays f32 in scratch.
    xb = x.astype(jnp.bfloat16)
    wb = w.astype(jnp.bfloat16)
    kernel = functools.partial(_linear_bn_kernel, do_relu=do_relu)
    return pl.pallas_call(
        kernel,
        out_shape=jax.ShapeDtypeStruct((B, N), jnp.bfloat16),
        grid_spec=pltpu.PrefetchScalarGridSpec(
            num_scalar_prefetch=0,
            grid=(N // tn, K // tk),                      # reduction axis (K) last
            in_specs=[pl.BlockSpec((B, tk), lambda n, k: (0, k)),
                      pl.BlockSpec((tk, tn), lambda n, k: (k, n))],
            out_specs=pl.BlockSpec((B, tn), lambda n, k: (0, n)),
            scratch_shapes=[pltpu.VMEM((B, tn), jnp.float32)]),
        compiler_params=pltpu.CompilerParams(
            dimension_semantics=("parallel", "arbitrary"),
            vmem_limit_bytes=64 << 20),
    )(xb, wb)


# ---------------------------------------------------------------------------
# Kernel 2: row-wise L2 normalization (F.normalize(x, dim=1)).  Done ONCE per
#           tensor, tiled over rows so production-size banks pipeline through
#           VMEM (and the "parallel" axis shards across v7x's 2 TensorCores).
#           f32 math in-kernel; bf16 output feeds every downstream matmul.
# ---------------------------------------------------------------------------
def _l2norm_kernel(x_ref, o_ref):
    x = x_ref[...].astype(jnp.float32)
    ss = jnp.sum(x * x, axis=1, keepdims=True)
    # x / max(||x||, eps)  ==  x * rsqrt(max(ss, eps^2))   (rsqrt -> EUP slot)
    o_ref[...] = (x * jax.lax.rsqrt(jnp.maximum(ss, L2_EPS * L2_EPS))).astype(o_ref.dtype)


def l2_normalize_rows(x, *, out_dtype=jnp.bfloat16, tr_pref=1024):
    R, D = x.shape
    tr = _pick_tile(R, tr_pref, multiple=8)
    return pl.pallas_call(
        _l2norm_kernel,
        out_shape=jax.ShapeDtypeStruct((R, D), out_dtype),
        grid_spec=pltpu.PrefetchScalarGridSpec(
            num_scalar_prefetch=0,
            grid=(R // tr,),
            in_specs=[pl.BlockSpec((tr, D), lambda i: (i, 0))],
            out_specs=pl.BlockSpec((tr, D), lambda i: (i, 0))),
        compiler_params=pltpu.CompilerParams(
            dimension_semantics=("parallel",)),
    )(x)


# ---------------------------------------------------------------------------
# Kernel 3: memory-bank similarity:  q_norm @ bank_norm.T, tiled over bank rows.
#           Inputs are pre-normalized bf16 (cast hoisted to the producers), so the
#           bank-read-bound scan moves half the bytes of the f32 version and the
#           kernel body is a single MXU call (no per-tile VPU casts).
# ---------------------------------------------------------------------------
def _nn_similarity_kernel(q_ref, bank_ref, o_ref):
    o_ref[...] = jax.lax.dot_general(q_ref[...], bank_ref[...], _DOT_NT,
                                     preferred_element_type=jnp.float32)


def nn_similarity(q_norm, bank_norm, *, tbank_pref=1024):
    """q_norm: (B, D) pre-normalized bf16; bank_norm: (K, D) pre-normalized bf16
    -> (B, K) f32 sims.  tbank kept moderate so small banks still get >=2 pipeline
    steps (hides the first tile's HBM fetch)."""
    B, D = q_norm.shape
    K, _ = bank_norm.shape
    tb = _pick_tile(K, tbank_pref)
    qb = q_norm.astype(jnp.bfloat16)
    bb = bank_norm.astype(jnp.bfloat16)
    return pl.pallas_call(
        _nn_similarity_kernel,
        out_shape=jax.ShapeDtypeStruct((B, K), jnp.float32),
        grid_spec=pltpu.PrefetchScalarGridSpec(
            num_scalar_prefetch=0,
            grid=(K // tb,),
            in_specs=[pl.BlockSpec((B, D), lambda i: (0, 0)),
                      pl.BlockSpec((tb, D), lambda i: (i, 0))],
            out_specs=pl.BlockSpec((B, tb), lambda i: (0, i))),
        compiler_params=pltpu.CompilerParams(
            dimension_semantics=("parallel",),
            vmem_limit_bytes=64 << 20),
    )(qb, bb)


# ---------------------------------------------------------------------------
# Kernel 4: fused cross-attention scores + contrastive loss.
#
#   zcat = [z_k_n ; z_k_nn_n]  (concatenated once in the wrapper, bf16)
#   cross_attn = softmax over NN columns of  z_q_n @ zcat.T  (key columns and
#                foreign NN groups masked; mask built from iota, masked columns
#                zeroed after exp so no -999 constant can leak mass)
#   logits     = p_q_n @ zcat.T / tem          (ONE MXU call for keys + NNs)
#   weights    = eye (key columns) + cross_attn (NN columns)
#   loss       = mean_i( -sum_j weights[i,j] * (logits[i,j] - lse_i) )
#
#   All tensors here are (B, *) / (B*(topk+1), D) — tiny even at production B,
#   so whole-VMEM residency is well under v7x's 64 MiB budget.
# ---------------------------------------------------------------------------
def _snclr_loss_kernel(pq_ref, zq_ref, zcat_ref, loss_ref, *, topk, tem):
    B = pq_ref.shape[0]
    T = zcat_ref.shape[0]          # B * (topk + 1):  [keys (B) ; NNs (B*topk)]

    pq = pq_ref[...]
    zq = zq_ref[...]
    zcat = zcat_ref[...]

    row = jax.lax.broadcasted_iota(jnp.int32, (B, T), 0)
    col = jax.lax.broadcasted_iota(jnp.int32, (B, T), 1)

    # --- cross-attention positive weights over own-group NN columns only ---
    ca_raw = jax.lax.dot_general(zq, zcat, _DOT_NT, preferred_element_type=jnp.float32)
    own_group = jnp.logical_and(col >= B + row * topk, col < B + (row + 1) * topk)
    ca_masked = jnp.where(own_group, ca_raw, -jnp.inf)
    ca_m = jnp.max(ca_masked, axis=1, keepdims=True)
    ca_e = jnp.where(own_group, jnp.exp(ca_masked - ca_m), 0.0)
    ca = ca_e * pl.reciprocal(jnp.sum(ca_e, axis=1, keepdims=True), approx=True)
    # TODO(synk): self.threshold branch omitted (threshold=False default).

    # positive weights: identity on key columns + cross-attn on NN columns
    weights = (col == row).astype(jnp.float32) + ca

    # --- logits against keys and nearest neighbours in ONE MXU call (f32 epilogue) ---
    logits = jax.lax.dot_general(pq, zcat, _DOT_NT,
                                 preferred_element_type=jnp.float32) * (1.0 / tem)
    m = jnp.max(logits, axis=1, keepdims=True)
    lse = m + jnp.log(jnp.sum(jnp.exp(logits - m), axis=1, keepdims=True))

    per_row = -jnp.sum(weights * (logits - lse), axis=1, keepdims=True)   # (B, 1)
    loss_ref[...] = jnp.sum(per_row, axis=0, keepdims=True) * (1.0 / B)


def snclr_loss(p_q_n, z_q_n, z_kcat_n, *, topk, tem):
    vmem = pl.BlockSpec(memory_space=pltpu.MemorySpace.VMEM)
    out = pl.pallas_call(
        functools.partial(_snclr_loss_kernel, topk=topk, tem=tem),
        out_shape=jax.ShapeDtypeStruct((1, 1), jnp.float32),
        in_specs=[vmem, vmem, vmem],
        out_specs=vmem,
    )(p_q_n, z_q_n, z_kcat_n)
    return out[0, 0]


# ---------------------------------------------------------------------------
# Parameter setup (deterministic, PyTorch nn.Linear default init U(-1/sqrt(fan_in), ...))
# ---------------------------------------------------------------------------
def init_linear(key, fan_in, fan_out):
    bound = 1.0 / (fan_in ** 0.5)
    return jax.random.uniform(key, (fan_in, fan_out), jnp.float32, -bound, bound)


def init_params(key, *, in_features, feat_dim, hidden_dim, dim):
    keys = jax.random.split(key, 6)
    return {
        "enc": init_linear(keys[0], in_features, feat_dim),
        "proj": [init_linear(keys[1], feat_dim, hidden_dim),
                 init_linear(keys[2], hidden_dim, hidden_dim),
                 init_linear(keys[3], hidden_dim, dim)],
        "pred": [init_linear(keys[4], dim, hidden_dim),
                 init_linear(keys[5], hidden_dim, dim)],
    }


def update_momentum_params(p, p_ema, m):
    """p_ema <- m * p_ema + (1 - m) * p   (update_momentum with m = self.momentum = -1,
    mirroring the reference module's default)."""
    return jax.tree_util.tree_map(lambda a, b: m * b + (1.0 - m) * a, p, p_ema)


# ---------------------------------------------------------------------------
# Forward pieces
# ---------------------------------------------------------------------------
def encode(im_nchw, enc_w):
    x = im_nchw.reshape(im_nchw.shape[0], -1)          # NCHW -> (B, C*H*W)
    return linear_bn(x, enc_w, do_relu=True)


def mlp_forward(x, weights, relu_flags):
    for w, do_relu in zip(weights, relu_flags):
        x = linear_bn(x, w, do_relu=do_relu)
    return x


def contrastive_loss(params, params_m, bank_norm, bank_labels, im_q, im_k, labels,
                     *, topk, tem, shuffle_key):
    B = im_q.shape[0]
    dim = params["proj"][-1].shape[1]

    # --- online branch ---
    feat_q = encode(im_q, params["enc"])
    z_q = mlp_forward(feat_q, params["proj"], (True, True, False))
    p_q = mlp_forward(z_q, params["pred"], (True, False))

    # --- momentum branch with batch shuffle / unshuffle ---
    perm = jax.random.permutation(shuffle_key, B)
    inv_perm = jnp.argsort(perm)
    im_k_shuf = jnp.take(im_k, perm, axis=0)
    feat_k = encode(im_k_shuf, params_m["enc"])
    z_k_shuf = mlp_forward(feat_k, params_m["proj"], (True, True, False))
    z_k = jnp.take(z_k_shuf, inv_perm, axis=0)

    # --- normalize once (bf16 outputs); all downstream matmuls consume these ---
    z_q_n = l2_normalize_rows(z_q)
    p_q_n = l2_normalize_rows(p_q)
    z_k_n = l2_normalize_rows(z_k)

    # --- memory-bank nearest-neighbour lookup (tiled bf16 similarity in Pallas) ---
    # NOTE: bf16 cosine sims can flip top-k indices on near-ties vs an f32 reference.
    sim = nn_similarity(z_k_n, bank_norm)                    # (B, K) f32
    _, idx = jax.lax.top_k(sim, topk)                        # (B, topk)
    nn_feats = jnp.take(bank_norm, idx, axis=0)              # (B, topk, dim), normalized
    purity = jnp.mean((jnp.take(bank_labels, idx, axis=0) ==
                       labels[:, None]).astype(jnp.float32))
    z_k_nn_n = nn_feats.reshape(B * topk, dim)               # [nn_t(key_j)] row-major

    # --- fused cross-attention + contrastive loss (Pallas, single merged RHS) ---
    z_kcat_n = jnp.concatenate([z_k_n, z_k_nn_n], axis=0)    # (B*(topk+1), dim) bf16
    loss = snclr_loss(p_q_n, z_q_n, z_kcat_n, topk=topk, tem=tem)
    return loss, purity


def snclr_forward(params, params_m, bank, bank_labels, im1, im2, labels,
                  *, topk, tem, momentum, shuffle_key):
    # update_momentum on backbone + projection head (m = momentum = -1)
    params_m = {
        "enc": update_momentum_params(params["enc"], params_m["enc"], momentum),
        "proj": update_momentum_params(params["proj"], params_m["proj"], momentum),
    }
    # bank is normalized once (bf16) and reused (similarity + gathered NN features).
    bank_norm = l2_normalize_rows(bank)
    # symmetric=False -> single direction (im1 -> query, im2 -> key), update=True
    loss_12, purity_12 = contrastive_loss(
        params, params_m, bank_norm, bank_labels, im1, im2, labels,
        topk=topk, tem=tem, shuffle_key=shuffle_key)
    return loss_12, purity_12


# ---------------------------------------------------------------------------
# Main
# ---------------------------------------------------------------------------
if __name__ == "__main__":
    # Small shapes consistent with the module (scaled down):
    #   images (B, C, H, W) = (8, 3, 16, 16), backbone feat 128 (stands in for 512),
    #   mlp hidden 256 (for 2048), embedding dim 64 (for 128), bank K = 128 (for 4096).
    B, C, H, W = 8, 3, 16, 16
    FEAT, HIDDEN, DIM = 128, 256, 64
    K_BANK, TOPK, TEM, MOMENTUM = 128, 2, 0.1, -1.0

    root = jax.random.PRNGKey(0)
    k_param, k_bank, k_blab, k_im1, k_im2, k_lab, k_shuf = jax.random.split(root, 7)

    params = init_params(k_param, in_features=C * H * W,
                         feat_dim=FEAT, hidden_dim=HIDDEN, dim=DIM)
    # deepcopy -> momentum branch starts identical to the online branch
    params_m = {"enc": params["enc"], "proj": list(params["proj"])}

    bank = jax.random.normal(k_bank, (K_BANK, DIM), jnp.float32)
    bank_labels = jax.random.randint(k_blab, (K_BANK,), 0, 10, jnp.int32)

    im1 = jax.random.normal(k_im1, (B, C, H, W), jnp.float32)
    im2 = jax.random.normal(k_im2, (B, C, H, W), jnp.float32)
    labels = jax.random.randint(k_lab, (B,), 0, 10, jnp.int32)

    loss, purity = snclr_forward(params, params_m, bank, bank_labels,
                                 im1, im2, labels,
                                 topk=TOPK, tem=TEM, momentum=MOMENTUM,
                                 shuffle_key=k_shuf)
    loss = jax.block_until_ready(loss)
    purity = jax.block_until_ready(purity)
    assert jnp.isfinite(loss) and jnp.isfinite(purity)
    print("KERNEL_OK")
</pallas_src>

<mosaic_0001>
module attributes {stable_mosaic.version = 11 : i64} {
  func.func @_l2norm_kernel(%arg0: i32, %arg1: memref<128x64xf32, #tpu.memory_space<vmem>>, %arg2: memref<128x64xbf16, #tpu.memory_space<vmem>>) attributes {dimension_semantics = [#tpu.dimension_semantics<parallel>], iteration_bounds = array<i64: 1>, scalar_prefetch = 0 : i64, scratch_operands = 0 : i64, tpu.core_type = #tpu.core_type<tc>, window_params = [{transform_indices = @transform_0, window_bounds = array<i64: 128, 64>}, {transform_indices = @transform_1, window_bounds = array<i64: 128, 64>}]} {
    %c0 = arith.constant 0 : index
    %c0_0 = arith.constant 0 : index
    %0 = vector.load %arg1[%c0, %c0_0] : memref<128x64xf32, #tpu.memory_space<vmem>>, vector<128x64xf32>
    %1 = arith.mulf %0, %0 : vector<128x64xf32>
    %cst = arith.constant dense<0.000000e+00> : vector<128xf32>
    %2 = vector.multi_reduction <add>, %1, %cst [1] : vector<128x64xf32> to vector<128xf32>
    %3 = vector.shape_cast %2 : vector<128xf32> to vector<128x1xf32>
    %cst_1 = arith.constant 1.000000e-24 : f32
    %4 = vector.broadcast %cst_1 : f32 to vector<128x1xf32>
    %5 = arith.maximumf %3, %4 : vector<128x1xf32>
    %6 = math.rsqrt %5 : vector<128x1xf32>
    %7 = vector.broadcast %6 : vector<128x1xf32> to vector<128x64xf32>
    %8 = arith.mulf %0, %7 : vector<128x64xf32>
    %9 = arith.truncf %8 : vector<128x64xf32> to vector<128x64xbf16>
    %c0_2 = arith.constant 0 : index
    %c0_3 = arith.constant 0 : index
    %10 = vector.load %arg2[%c0_2, %c0_3] : memref<128x64xbf16, #tpu.memory_space<vmem>>, vector<128x64xbf16>
    tpu.vector_store %arg2[%c0_2, %c0_3], %9 {strides = array<i32>} : memref<128x64xbf16, #tpu.memory_space<vmem>>, vector<128x64xbf16>,
    return
  }
  func.func @transform_0(%arg0: i32) -> (i32, i32) {
    %c0_i32 = arith.constant 0 : i32
    %c0_i32_0 = arith.constant 0 : i32
    return %arg0, %c0_i32 : i32, i32
  }
  func.func @transform_1(%arg0: i32) -> (i32, i32) {
    %c0_i32 = arith.constant 0 : i32
    %c0_i32_0 = arith.constant 0 : i32
    return %arg0, %c0_i32 : i32, i32
  }
}

</mosaic_0001>

<llo_original>
// kernel: tpu_custom_call.1
$region0: #{tpu_custom_call.1}
  #allocation0 [shape = 'u32[]', space=smem, size = 0x4, offset = 0x4, fixed_abs, tag = 'smem constant byte address 0x4 - core index']
  #allocation1 [shape = 'u32[144,128]{1,0:T(1,128)}', space=vmem, size = 0x12000, scoped, tag = 'internal scratch']
  %s0 = inlined_call_operand.vmem [shape: f32[128,64], index: 0, kind: input, shape index: {}]
  %s1 = inlined_call_operand.vmem [shape: bf16[128,64], index: 1, kind: output, shape index: {}]
  %s2 = sld [smem:[#allocation0]]
  $region14: #{tpu_custom_call.1} parent=0
    _
  %s4 = ssub.s32 1, %s2
  %s5 = scalar_select 0, %s4, %s2
  // Predicated region
  $region2: #{tpu_custom_call.1} parent=0 // pred_check
    _
  $region3: #{tpu_custom_call.1} parent=0 // pred_check_branch
    %7 = sbr.rel (0) target = $region5
  $region4: #{tpu_custom_call.1} parent=0 // pred_region
    _
  $region5: #{tpu_custom_call.1} parent=0 // pred_fallthru
    _
  %v8 = vld [vmem:[%s0] sm:$0xff]
  %v9 = vld [vmem:[%s0 + $0x8] sm:$0xff]
  %v10 = vld [vmem:[%s0 + $0x10] sm:$0xff]
  %v11 = vld [vmem:[%s0 + $0x18] sm:$0xff]
  %v12 = vld [vmem:[%s0 + $0x20] sm:$0xff]
  %v13 = vld [vmem:[%s0 + $0x28] sm:$0xff]
  %v14 = vld [vmem:[%s0 + $0x30] sm:$0xff]
  %v15 = vld [vmem:[%s0 + $0x38] sm:$0xff]
  %v16 = vld [vmem:[%s0 + $0x40] sm:$0xff]
  %v17 = vld [vmem:[%s0 + $0x48] sm:$0xff]
  %v18 = vld [vmem:[%s0 + $0x50] sm:$0xff]
  %v19 = vld [vmem:[%s0 + $0x58] sm:$0xff]
  %v20 = vld [vmem:[%s0 + $0x60] sm:$0xff]
  %v21 = vld [vmem:[%s0 + $0x68] sm:$0xff]
  %v22 = vld [vmem:[%s0 + $0x70] sm:$0xff]
  %v23 = vld [vmem:[%s0 + $0x78] sm:$0xff]
  %v24 = vmul.f32 %v8, %v8
  %v25 = vmul.f32 %v9, %v9
  %v26 = vmul.f32 %v10, %v10
  %v27 = vmul.f32 %v11, %v11
  %v28 = vmul.f32 %v12, %v12
  %v29 = vmul.f32 %v13, %v13
  %v30 = vmul.f32 %v14, %v14
  %v31 = vmul.f32 %v15, %v15
  %v32 = vmul.f32 %v16, %v16
  %v33 = vmul.f32 %v17, %v17
  %v34 = vmul.f32 %v18, %v18
  %v35 = vmul.f32 %v19, %v19
  %v36 = vmul.f32 %v20, %v20
  %v37 = vmul.f32 %v21, %v21
  %v38 = vmul.f32 %v22, %v22
  %v39 = vmul.f32 %v23, %v23
  %vm40 = vcmask 523264
  %v41 = vsel %vm40, %v24, 0.0
  %42 = vadd.xlane.f32.xlu0 %v41
  %v43 = vpop.xlane.xlu0 %42
  %v44 = vsel %vm40, %v25, 0.0
  %45 = vadd.xlane.f32.xlu0 %v44
  %v46 = vpop.xlane.xlu0 %45
  %v47 = vsel %vm40, %v26, 0.0
  %48 = vadd.xlane.f32.xlu0 %v47
  %v49 = vpop.xlane.xlu0 %48
  %v50 = vsel %vm40, %v27, 0.0
  %51 = vadd.xlane.f32.xlu0 %v50
  %v52 = vpop.xlane.xlu0 %51
  %v53 = vsel %vm40, %v28, 0.0
  %54 = vadd.xlane.f32.xlu0 %v53
  %v55 = vpop.xlane.xlu0 %54
  %v56 = vsel %vm40, %v29, 0.0
  %57 = vadd.xlane.f32.xlu0 %v56
  %v58 = vpop.xlane.xlu0 %57
  %v59 = vsel %vm40, %v30, 0.0
  %60 = vadd.xlane.f32.xlu0 %v59
  %v61 = vpop.xlane.xlu0 %60
  %v62 = vsel %vm40, %v31, 0.0
  %63 = vadd.xlane.f32.xlu0 %v62
  %v64 = vpop.xlane.xlu0 %63
  %v65 = vsel %vm40, %v32, 0.0
  %66 = vadd.xlane.f32.xlu0 %v65
  %v67 = vpop.xlane.xlu0 %66
  %v68 = vsel %vm40, %v33, 0.0
  %69 = vadd.xlane.f32.xlu0 %v68
  %v70 = vpop.xlane.xlu0 %69
  %v71 = vsel %vm40, %v34, 0.0
  %72 = vadd.xlane.f32.xlu0 %v71
  %v73 = vpop.xlane.xlu0 %72
  %v74 = vsel %vm40, %v35, 0.0
  %75 = vadd.xlane.f32.xlu0 %v74
  %v76 = vpop.xlane.xlu0 %75
  %v77 = vsel %vm40, %v36, 0.0
  %78 = vadd.xlane.f32.xlu0 %v77
  %v79 = vpop.xlane.xlu0 %78
  %v80 = vsel %vm40, %v37, 0.0
  %81 = vadd.xlane.f32.xlu0 %v80
  %v82 = vpop.xlane.xlu0 %81
  %v83 = vsel %vm40, %v38, 0.0
  %84 = vadd.xlane.f32.xlu0 %v83
  %v85 = vpop.xlane.xlu0 %84
  %v86 = vsel %vm40, %v39, 0.0
  %87 = vadd.xlane.f32.xlu0 %v86
  %v88 = vpop.xlane.xlu0 %87
  %v89 = vmax.f32 %v43, 1e-24
  %v90 = vmax.f32 %v46, 1e-24
  %v91 = vmax.f32 %v49, 1e-24
  %v92 = vmax.f32 %v52, 1e-24
  %v93 = vmax.f32 %v55, 1e-24
  %v94 = vmax.f32 %v58, 1e-24
  %v95 = vmax.f32 %v61, 1e-24
  %v96 = vmax.f32 %v64, 1e-24
  %v97 = vmax.f32 %v67, 1e-24
  %v98 = vmax.f32 %v70, 1e-24
  %v99 = vmax.f32 %v73, 1e-24
  %v100 = vmax.f32 %v76, 1e-24
  %v101 = vmax.f32 %v79, 1e-24
  %v102 = vmax.f32 %v82, 1e-24
  %v103 = vmax.f32 %v85, 1e-24
  %v104 = vmax.f32 %v88, 1e-24
  %v105 = vrsqrt.pop %v89
  %v106 = vrsqrt.pop %v90
  %v107 = vrsqrt.pop %v91
  %v108 = vrsqrt.pop %v92
  %v109 = vrsqrt.pop %v93
  %v110 = vrsqrt.pop %v94
  %v111 = vrsqrt.pop %v95
  %v112 = vrsqrt.pop %v96
  %v113 = vrsqrt.pop %v97
  %v114 = vrsqrt.pop %v98
  %v115 = vrsqrt.pop %v99
  %v116 = vrsqrt.pop %v100
  %v117 = vrsqrt.pop %v101
  %v118 = vrsqrt.pop %v102
  %v119 = vrsqrt.pop %v103
  %v120 = vrsqrt.pop %v104
  %v121 = vmul.f32 %v8, %v105
  %v122 = vmul.f32 %v9, %v106
  %v123 = vmul.f32 %v10, %v107
  %v124 = vmul.f32 %v11, %v108
  %v125 = vmul.f32 %v12, %v109
  %v126 = vmul.f32 %v13, %v110
  %v127 = vmul.f32 %v14, %v111
  %v128 = vmul.f32 %v15, %v112
  %v129 = vmul.f32 %v16, %v113
  %v130 = vmul.f32 %v17, %v114
  %v131 = vmul.f32 %v18, %v115
  %v132 = vmul.f32 %v19, %v116
  %v133 = vmul.f32 %v20, %v117
  %v134 = vmul.f32 %v21, %v118
  %v135 = vmul.f32 %v22, %v119
  %v136 = vmul.f32 %v23, %v120
  %v137 = vpack.c.bf16 %v122, %v121
  %v138 = vpack.c.bf16 %v124, %v123
  %v139 = vpack.c.bf16 %v126, %v125
  %v140 = vpack.c.bf16 %v128, %v127
  %v141 = vpack.c.bf16 %v130, %v129
  %v142 = vpack.c.bf16 %v132, %v131
  %v143 = vpack.c.bf16 %v134, %v133
  %v144 = vpack.c.bf16 %v136, %v135
  %v153 = vunpack.c.l.b16 %v137
  %v154 = vunpack.c.h.b16 %v137
  %v155 = vunpack.c.l.b16 %v138
  %v156 = vunpack.c.h.b16 %v138
  %v157 = vunpack.c.l.b16 %v139
  %v158 = vunpack.c.h.b16 %v139
  %v159 = vunpack.c.l.b16 %v140
  %v160 = vunpack.c.h.b16 %v140
  %v161 = vunpack.c.l.b16 %v141
  %v162 = vunpack.c.h.b16 %v141
  %v163 = vunpack.c.l.b16 %v142
  %v164 = vunpack.c.h.b16 %v142
  %v165 = vunpack.c.l.b16 %v143
  %v166 = vunpack.c.h.b16 %v143
  %v167 = vunpack.c.l.b16 %v144
  %v168 = vunpack.c.h.b16 %v144
  %v169 = vpack.c.b16 %v153, %v153
  %v170 = vpack.c.b16 %v154, %v154
  %v171 = vpack.c.b16 %v155, %v155
  %v172 = vpack.c.b16 %v156, %v156
  %v173 = vpack.c.b16 %v157, %v157
  %v174 = vpack.c.b16 %v158, %v158
  %v175 = vpack.c.b16 %v159, %v159
  %v176 = vpack.c.b16 %v160, %v160
  %v177 = vpack.c.b16 %v161, %v161
  %v178 = vpack.c.b16 %v162, %v162
  %v179 = vpack.c.b16 %v163, %v163
  %v180 = vpack.c.b16 %v164, %v164
  %v181 = vpack.c.b16 %v165, %v165
  %v182 = vpack.c.b16 %v166, %v166
  %v183 = vpack.c.b16 %v167, %v167
  %v184 = vpack.c.b16 %v168, %v168
  %vm201 = vcmask 519168
  %202 = vst.msk [vmem:[%s1] sm:$0xf] %vm201, %v169
  %203 = vst.msk [vmem:[%s1 + $0x4] sm:$0xf] %vm201, %v170
  %204 = vst.msk [vmem:[%s1 + $0x8] sm:$0xf] %vm201, %v171
  %205 = vst.msk [vmem:[%s1 + $0xc] sm:$0xf] %vm201, %v172
  %206 = vst.msk [vmem:[%s1 + $0x10] sm:$0xf] %vm201, %v173
  %207 = vst.msk [vmem:[%s1 + $0x14] sm:$0xf] %vm201, %v174
  %208 = vst.msk [vmem:[%s1 + $0x18] sm:$0xf] %vm201, %v175
  %209 = vst.msk [vmem:[%s1 + $0x1c] sm:$0xf] %vm201, %v176
  %210 = vst.msk [vmem:[%s1 + $0x20] sm:$0xf] %vm201, %v177
  %211 = vst.msk [vmem:[%s1 + $0x24] sm:$0xf] %vm201, %v178
  %212 = vst.msk [vmem:[%s1 + $0x28] sm:$0xf] %vm201, %v179
  %213 = vst.msk [vmem:[%s1 + $0x2c] sm:$0xf] %vm201, %v180
  %214 = vst.msk [vmem:[%s1 + $0x30] sm:$0xf] %vm201, %v181
  %215 = vst.msk [vmem:[%s1 + $0x34] sm:$0xf] %vm201, %v182
  %216 = vst.msk [vmem:[%s1 + $0x38] sm:$0xf] %vm201, %v183
  %217 = vst.msk [vmem:[%s1 + $0x3c] sm:$0xf] %vm201, %v184
  // Predicated region
  $region6: #{tpu_custom_call.1} parent=0 // pred_check
    _
  $region7: #{tpu_custom_call.1} parent=0 // pred_check_branch
    %219 = sbr.rel (0) target = $region9
  $region8: #{tpu_custom_call.1} parent=0 // pred_region
    _
  $region9: #{tpu_custom_call.1} parent=0 // pred_fallthru
    _
  // Predicated region
  $region10: #{tpu_custom_call.1} parent=0 // pred_check
    _
  $region11: #{tpu_custom_call.1} parent=0 // pred_check_branch
    %221 = sbr.rel (0) target = $region13
  $region12: #{tpu_custom_call.1} parent=0 // pred_region
    _
  $region13: #{tpu_custom_call.1} parent=0 // pred_fallthru
    _

</llo_original>
